<compile_context>
chip_gen: v7x
topology: tpu7x:2x2x1
jax: 0.10.0
libtpu: 0.0.40
codegen_flags: <defaults>
</compile_context>

<pallas_src>
import math

import jax
import jax.numpy as jnp
from jax import lax
from jax.experimental import pallas as pl
from jax.experimental.pallas import tpu as pltpu

_BN_EPS = 1e-5


# ------------------------------- kernels -------------------------------------

def _conv1x1_stats_kernel(x_ref, w_ref, z_ref, s_ref, q_ref):
    """1x1 conv (channel matmul) + per-batch per-channel sum / sumsq."""
    z = jnp.dot(w_ref[...], x_ref[0], preferred_element_type=jnp.float32)
    z_ref[0] = z
    s_ref[0] = jnp.sum(z, axis=-1, keepdims=True)
    q_ref[0] = jnp.sum(z * z, axis=-1, keepdims=True)


def _bn_relu_conv1x1_stats_kernel(z_ref, scale_ref, shift_ref, w_ref,
                                  o_ref, s_ref, q_ref):
    """Fused BN-apply + ReLU + 1x1 conv + per-batch stats."""
    y = jnp.maximum(z_ref[0] * scale_ref[...] + shift_ref[...], 0.0)
    z = jnp.dot(w_ref[...], y, preferred_element_type=jnp.float32)
    o_ref[0] = z
    s_ref[0] = jnp.sum(z, axis=-1, keepdims=True)
    q_ref[0] = jnp.sum(z * z, axis=-1, keepdims=True)


def _make_bn_relu_conv3x3_stats_kernel(height, width, c_out):
    """Fused BN-apply + ReLU + 3x3 conv (stride=1, pad=1) + per-batch stats.

    Spatial dims are flattened onto the lane axis (n = h*width + w). Each of
    the 9 taps = lane rotation (pltpu.roll) + wrap mask + MXU matmul.
    """
    n = height * width

    def kernel(z_ref, scale_ref, shift_ref, w_ref, o_ref, s_ref, q_ref):
        y = jnp.maximum(z_ref[0] * scale_ref[...] + shift_ref[...], 0.0)
        pos = lax.broadcasted_iota(jnp.int32, (1, n), 1)
        row = pos // width
        col = pos % width
        acc = jnp.zeros((c_out, n), jnp.float32)
        tap = 0
        for oy in (-1, 0, 1):
            for ox in (-1, 0, 1):
                d = oy * width + ox
                # shifted[c, p] == y[c, p + d] (wrapped values masked below)
                shifted = y if d == 0 else pltpu.roll(y, (-d) % n, axis=1)
                valid = ((row + oy >= 0) & (row + oy < height) &
                         (col + ox >= 0) & (col + ox < width))
                shifted = jnp.where(valid, shifted, 0.0)
                acc = acc + jnp.dot(w_ref[tap], shifted,
                                    preferred_element_type=jnp.float32)
                tap += 1
        o_ref[0] = acc
        s_ref[0] = jnp.sum(acc, axis=-1, keepdims=True)
        q_ref[0] = jnp.sum(acc * acc, axis=-1, keepdims=True)

    return kernel


def _bn_residual_relu_kernel(z_ref, res_ref, scale_ref, shift_ref, o_ref):
    """Final BN-apply + identity residual + ReLU."""
    out = z_ref[0] * scale_ref[...] + shift_ref[...] + res_ref[0]
    o_ref[0] = jnp.maximum(out, 0.0).astype(o_ref.dtype)


# ------------------------------- wrapper --------------------------------------

def _bn_fold(s, q, count, eps=_BN_EPS):
    """Fold training-mode BN (gamma=1, beta=0) into per-channel scale/shift."""
    mean = jnp.sum(s, axis=0) / count                 # (C, 1)
    var = jnp.sum(q, axis=0) / count - mean * mean    # one-pass E[z^2]-mean^2
    inv_std = lax.rsqrt(var + eps)
    return inv_std, -mean * inv_std


def bottleneck_forward(x_nchw, params):
    b, c_in, h, w = x_nchw.shape
    n = h * w
    w1, w3, w5 = params["w1"], params["w3"], params["w5"]
    places = w1.shape[0]
    c_out = w5.shape[0]
    assert c_out == c_in, "identity residual requires in_places == places*expansion"
    # TODO(synk): stride>1 / downsampling=True branch (strided 3x3 + downsample
    # conv on the residual) is not implemented; this covers the default config.

    x = x_nchw.reshape(b, c_in, n).astype(jnp.float32)
    fp32 = jnp.float32
    parallel = pltpu.CompilerParams(dimension_semantics=("parallel",))

    def act_spec(c):
        return pl.BlockSpec((1, c, n), lambda i: (i, 0, 0))

    def stat_spec(c):
        return pl.BlockSpec((1, c, 1), lambda i: (i, 0, 0))

    def bcast_spec(shape):
        nd = len(shape)
        return pl.BlockSpec(shape, lambda i: (0,) * nd)

    def stat_shapes(c):
        return [jax.ShapeDtypeStruct((b, c, 1), fp32)] * 2

    # -- stage 1: conv1 (1x1, c_in -> places) + batch stats --------------------
    z1, s1, q1 = pl.pallas_call(
        _conv1x1_stats_kernel,
        grid=(b,),
        in_specs=[act_spec(c_in), bcast_spec((places, c_in))],
        out_specs=[act_spec(places), stat_spec(places), stat_spec(places)],
        out_shape=[jax.ShapeDtypeStruct((b, places, n), fp32)] + stat_shapes(places),
        compiler_params=parallel,
    )(x, w1)
    scale1, shift1 = _bn_fold(s1, q1, b * n)

    # -- stage 2: BN1 + ReLU + conv2 (3x3, pad 1) + batch stats ----------------
    z2, s2, q2 = pl.pallas_call(
        _make_bn_relu_conv3x3_stats_kernel(h, w, places),
        grid=(b,),
        in_specs=[act_spec(places), bcast_spec((places, 1)),
                  bcast_spec((places, 1)), bcast_spec((9, places, places))],
        out_specs=[act_spec(places), stat_spec(places), stat_spec(places)],
        out_shape=[jax.ShapeDtypeStruct((b, places, n), fp32)] + stat_shapes(places),
        compiler_params=parallel,
        cost_estimate=pl.CostEstimate(
            flops=2 * b * 9 * places * places * n,
            transcendentals=0,
            bytes_accessed=4 * (2 * b * places * n + 9 * places * places)),
    )(z1, scale1, shift1, w3)
    scale2, shift2 = _bn_fold(s2, q2, b * n)

    # -- stage 3: BN2 + ReLU + conv3 (1x1, places -> c_out) + batch stats ------
    z3, s3, q3 = pl.pallas_call(
        _bn_relu_conv1x1_stats_kernel,
        grid=(b,),
        in_specs=[act_spec(places), bcast_spec((places, 1)),
                  bcast_spec((places, 1)), bcast_spec((c_out, places))],
        out_specs=[act_spec(c_out), stat_spec(c_out), stat_spec(c_out)],
        out_shape=[jax.ShapeDtypeStruct((b, c_out, n), fp32)] + stat_shapes(c_out),
        compiler_params=parallel,
    )(z2, scale2, shift2, w5)
    scale3, shift3 = _bn_fold(s3, q3, b * n)

    # -- stage 4: BN3 + identity residual + ReLU -------------------------------
    out = pl.pallas_call(
        _bn_residual_relu_kernel,
        grid=(b,),
        in_specs=[act_spec(c_out), act_spec(c_out),
                  bcast_spec((c_out, 1)), bcast_spec((c_out, 1))],
        out_specs=act_spec(c_out),
        out_shape=jax.ShapeDtypeStruct((b, c_out, n), x_nchw.dtype),
        compiler_params=parallel,
    )(z3, x, scale3, shift3)

    return out.reshape(b, c_out, h, w)


# ------------------------------- params / reference ---------------------------

def init_params(in_places, places, expansion, key):
    """Conv weights mimicking PyTorch's default kaiming_uniform(a=sqrt(5)) init."""
    c_out = places * expansion
    k1, k2, k3 = jax.random.split(key, 3)

    def conv_w(k, shape, fan_in):
        bound = 1.0 / math.sqrt(fan_in)
        return jax.random.uniform(k, shape, jnp.float32, -bound, bound)

    w1 = conv_w(k1, (places, in_places), in_places)              # 1x1 conv
    w3_oihw = conv_w(k2, (places, places, 3, 3), places * 9)     # 3x3 conv
    w5 = conv_w(k3, (c_out, places), places)                     # 1x1 conv
    # taps-leading layout (kh*3 + kw, c_out, c_in) for the Pallas 3x3 kernel
    w3 = jnp.transpose(w3_oihw, (2, 3, 0, 1)).reshape(9, places, places)
    return dict(w1=w1, w3=w3, w3_oihw=w3_oihw, w5=w5)


def _reference(x, params, eps=_BN_EPS):
    """Pure-JAX/XLA reference for the Bottleneck forward (training-mode BN)."""
    def bn_train(z):
        mean = jnp.mean(z, axis=(0, 2, 3), keepdims=True)
        var = jnp.mean((z - mean) ** 2, axis=(0, 2, 3), keepdims=True)
        return (z - mean) * lax.rsqrt(var + eps)

    dn = ("NCHW", "OIHW", "NCHW")
    w1 = params["w1"][:, :, None, None]
    w5 = params["w5"][:, :, None, None]
    z1 = lax.conv_general_dilated(x, w1, (1, 1), "VALID", dimension_numbers=dn)
    y1 = jnp.maximum(bn_train(z1), 0.0)
    z2 = lax.conv_general_dilated(y1, params["w3_oihw"], (1, 1),
                                  ((1, 1), (1, 1)), dimension_numbers=dn)
    y2 = jnp.maximum(bn_train(z2), 0.0)
    z3 = lax.conv_general_dilated(y2, w5, (1, 1), "VALID", dimension_numbers=dn)
    return jnp.maximum(bn_train(z3) + x, 0.0)


if __name__ == "__main__":
    # Bottleneck(in_places=16, places=4) with defaults (stride=1, downsampling=False,
    # expansion=4) -> identity residual requires in_places == places*expansion.
    B, IN_PLACES, PLACES, EXPANSION = 2, 16, 4, 4
    H, W = 16, 16    # N = H*W = 256, a multiple of 128 (lane-dense)

    key = jax.random.PRNGKey(0)
    kx, kp = jax.random.split(key)
    x = jax.random.normal(kx, (B, IN_PLACES, H, W), jnp.float32)
    params = init_params(IN_PLACES, PLACES, EXPANSION, kp)

    out = bottleneck_forward(x, params)
    out = jax.block_until_ready(out)

    ref = _reference(x, params)
    assert out.shape == (B, IN_PLACES, H, W)
    assert jnp.allclose(out, ref, atol=2e-4, rtol=2e-4), "mismatch vs JAX reference"
    print("KERNEL_OK")
</pallas_src>

<mosaic_0001>
module attributes {stable_mosaic.version = 11 : i64} {
  func.func @_conv1x1_stats_kernel(%arg0: i32, %arg1: memref<1x16x256xf32, #tpu.memory_space<vmem>>, %arg2: memref<4x16xf32, #tpu.memory_space<vmem>>, %arg3: memref<1x4x256xf32, #tpu.memory_space<vmem>>, %arg4: memref<1x4x1xf32, #tpu.memory_space<vmem>>, %arg5: memref<1x4x1xf32, #tpu.memory_space<vmem>>) attributes {dimension_semantics = [#tpu.dimension_semantics<parallel>], iteration_bounds = array<i64: 2>, scalar_prefetch = 0 : i64, scratch_operands = 0 : i64, tpu.core_type = #tpu.core_type<tc>, window_params = [{transform_indices = @transform_0, window_bounds = array<i64: 1, 16, 256>}, {pipeline_mode = #tpu.pipeline_mode<synchronous>, transform_indices = @transform_1, window_bounds = array<i64: 4, 16>}, {transform_indices = @transform_2, window_bounds = array<i64: 1, 4, 256>}, {transform_indices = @transform_3, window_bounds = array<i64: 1, 4, 1>}, {transform_indices = @transform_4, window_bounds = array<i64: 1, 4, 1>}]} {
    %c0 = arith.constant 0 : index
    %c0_0 = arith.constant 0 : index
    %0 = vector.load %arg2[%c0, %c0_0] : memref<4x16xf32, #tpu.memory_space<vmem>>, vector<4x16xf32>
    %c0_1 = arith.constant 0 : index
    %c0_2 = arith.constant 0 : index
    %c0_3 = arith.constant 0 : index
    %1 = vector.load %arg1[%c0_1, %c0_2, %c0_3] : memref<1x16x256xf32, #tpu.memory_space<vmem>>, vector<1x16x256xf32>
    %2 = vector.shape_cast %1 : vector<1x16x256xf32> to vector<16x256xf32>
    %cst = arith.constant dense<0.000000e+00> : vector<4x256xf32>
    %3 = tpu.matmul %0, %2, %cst {dimension_numbers = #tpu.dot_dimension_numbers<[1], [0], [0], [1], [0, 0, 1, 1], [], []>} : vector<4x16xf32>, vector<16x256xf32>, vector<4x256xf32> -> vector<4x256xf32>
    %c0_4 = arith.constant 0 : index
    %c0_5 = arith.constant 0 : index
    %c0_6 = arith.constant 0 : index
    %4 = vector.load %arg3[%c0_4, %c0_5, %c0_6] : memref<1x4x256xf32, #tpu.memory_space<vmem>>, vector<1x4x256xf32>
    %5 = vector.shape_cast %4 : vector<1x4x256xf32> to vector<4x256xf32>
    %6 = vector.shape_cast %3 : vector<4x256xf32> to vector<1x4x256xf32>
    tpu.vector_store %arg3[%c0_4, %c0_5, %c0_6], %6 {strides = array<i32>} : memref<1x4x256xf32, #tpu.memory_space<vmem>>, vector<1x4x256xf32>,
    %cst_7 = arith.constant dense<0.000000e+00> : vector<4xf32>
    %7 = vector.multi_reduction <add>, %3, %cst_7 [1] : vector<4x256xf32> to vector<4xf32>
    %8 = vector.shape_cast %7 : vector<4xf32> to vector<4x1xf32>
    %c0_8 = arith.constant 0 : index
    %c0_9 = arith.constant 0 : index
    %c0_10 = arith.constant 0 : index
    %9 = vector.load %arg4[%c0_8, %c0_9, %c0_10] : memref<1x4x1xf32, #tpu.memory_space<vmem>>, vector<1x4x1xf32>
    %10 = vector.shape_cast %9 : vector<1x4x1xf32> to vector<4x1xf32>
    %11 = vector.shape_cast %8 : vector<4x1xf32> to vector<1x4x1xf32>
    tpu.vector_store %arg4[%c0_8, %c0_9, %c0_10], %11 {strides = array<i32>} : memref<1x4x1xf32, #tpu.memory_space<vmem>>, vector<1x4x1xf32>,
    %12 = arith.mulf %3, %3 : vector<4x256xf32>
    %cst_11 = arith.constant dense<0.000000e+00> : vector<4xf32>
    %13 = vector.multi_reduction <add>, %12, %cst_11 [1] : vector<4x256xf32> to vector<4xf32>
    %14 = vector.shape_cast %13 : vector<4xf32> to vector<4x1xf32>
    %c0_12 = arith.constant 0 : index
    %c0_13 = arith.constant 0 : index
    %c0_14 = arith.constant 0 : index
    %15 = vector.load %arg5[%c0_12, %c0_13, %c0_14] : memref<1x4x1xf32, #tpu.memory_space<vmem>>, vector<1x4x1xf32>
    %16 = vector.shape_cast %15 : vector<1x4x1xf32> to vector<4x1xf32>
    %17 = vector.shape_cast %14 : vector<4x1xf32> to vector<1x4x1xf32>
    tpu.vector_store %arg5[%c0_12, %c0_13, %c0_14], %17 {strides = array<i32>} : memref<1x4x1xf32, #tpu.memory_space<vmem>>, vector<1x4x1xf32>,
    return
  }
  func.func @transform_0(%arg0: i32) -> (i32, i32, i32) {
    %c0_i32 = arith.constant 0 : i32
    %c0_i32_0 = arith.constant 0 : i32
    %c0_i32_1 = arith.constant 0 : i32
    return %arg0, %c0_i32, %c0_i32_0 : i32, i32, i32
  }
  func.func @transform_1(%arg0: i32) -> (i32, i32) {
    %c0_i32 = arith.constant 0 : i32
    %c0_i32_0 = arith.constant 0 : i32
    %c0_i32_1 = arith.constant 0 : i32
    return %c0_i32, %c0_i32_0 : i32, i32
  }
  func.func @transform_2(%arg0: i32) -> (i32, i32, i32) {
    %c0_i32 = arith.constant 0 : i32
    %c0_i32_0 = arith.constant 0 : i32
    %c0_i32_1 = arith.constant 0 : i32
    return %arg0, %c0_i32, %c0_i32_0 : i32, i32, i32
  }
  func.func @transform_3(%arg0: i32) -> (i32, i32, i32) {
    %c0_i32 = arith.constant 0 : i32
    %c0_i32_0 = arith.constant 0 : i32
    %c0_i32_1 = arith.constant 0 : i32
    return %arg0, %c0_i32, %c0_i32_0 : i32, i32, i32
  }
  func.func @transform_4(%arg0: i32) -> (i32, i32, i32) {
    %c0_i32 = arith.constant 0 : i32
    %c0_i32_0 = arith.constant 0 : i32
    %c0_i32_1 = arith.constant 0 : i32
    return %arg0, %c0_i32, %c0_i32_0 : i32, i32, i32
  }
}

</mosaic_0001>

<llo_original>
// kernel: tpu_custom_call.1
$region0: #{tpu_custom_call.1}
  #allocation0 [shape = 'u32[]', space=smem, size = 0x4, offset = 0x4, fixed_abs, tag = 'smem constant byte address 0x4 - core index']
  #allocation1 [shape = 'u32[144,128]{1,0:T(1,128)}', space=vmem, size = 0x12000, scoped, tag = 'internal scratch']
  %s0 = inlined_call_operand.hbm [shape: f32[2,16,256], index: 0, kind: input, shape index: {}]
  %s1 = inlined_call_operand.hbm [shape: f32[4,16], index: 1, kind: input, shape index: {}]
  %s2 = inlined_call_operand.hbm [shape: f32[2,4,256], index: 2, kind: output, shape index: {0}]
  %s3 = inlined_call_operand.vmem [shape: f32[2,4,1], index: 3, kind: output, shape index: {1}]
  %s4 = inlined_call_operand.vmem [shape: f32[2,4,1], index: 4, kind: output, shape index: {2}]
  %5 = xla_tuple %s2, %s3, %s4
  %s6 = sld [smem:[#allocation0]]
  $region65: #{tpu_custom_call.1} parent=0
    _
  %s8 = ssub.s32 1, %s6
  %s9 = scalar_select 0, %s8, %s6
  $region1: #{tpu_custom_call.1} parent=0
    #allocation2 [shape = 'u8[32768]{0}', space=vmem, size = 0x8000, scoped, tag = 'input window, operand 0']
    #allocation3 [shape = 's32[2]{0}', space=sflag, size = 0x8, scoped, tag = 'scoped memory for tpu_custom_call.1']
    #allocation4 [shape = 's32[2]{0}', space=sflag, size = 0x8, scoped, tag = 'scoped memory for tpu_custom_call.1']
    #allocation5 [shape = 'u8[2048]{0}', space=vmem, size = 0x800, scoped, tag = 'input window, operand 1, single buffered']
    #allocation6 [shape = 's32[1]{0}', space=sflag, size = 0x4, scoped, tag = 'scoped memory for tpu_custom_call.1']
    #allocation7 [shape = 'u8[8192]{0}', space=vmem, size = 0x2000, scoped, tag = 'output window, operand 0']
    %10 = vsyncpa [#allocation3], 0
    %s11 = scalar_lea.sflag [#allocation3], 1
    %12 = vsyncpa %s11, 0
    %13 = vsyncpa [#allocation6], 0
    %14 = vsyncpa [#allocation4], 0
    %s15 = scalar_lea.sflag [#allocation4], 1
    %16 = vsyncpa %s15, 0
    loop: start=0, step=1, limit=4
    $region2: #{tpu_custom_call.1} parent=1 // loop_pre_header
      _
    $region3: #{tpu_custom_call.1} parent=1 // loop_header
      %s18 = sphi 0, %s22
      %p19 = scmp.ge.s32.totalorder %s18, 4
      %s28 = sphi 0, %s30
      %s31 = sphi 0, %s28
      %s32 = sphi 0, %s31
      %s48 = sphi 0, %s32
      %s52 = sphi 0, %s52
      %s54 = sphi 0, %s52
      %s55 = sphi 0, %s54
      %s69 = sphi 0, %s55
      %s75 = sphi 0, %s77
      %s78 = sphi 0, %s75
      %s79 = sphi 0, %s78
      %s95 = sphi 0, %s79
      %s101 = sphi 0, %s103
      %s104 = sphi 0, %s101
      %s105 = sphi 0, %s104
      %s121 = sphi 0, %s105
      %s127 = sphi 0, %s129
      %s130 = sphi 0, %s127
      %s131 = sphi 0, %s130
      %s147 = sphi 0, %s131
    $region4: #{tpu_custom_call.1} parent=1 // loop_header_branch
      %21 = sbr.rel (%p19) target = $region8
    $region5: #{tpu_custom_call.1} parent=1 // loop_body
      %s23 = ssub.s32 %s18, 1
      %s24 = ssub.s32 %s18, 2
      %s25 = sadd.s32 %s18, 1
      %s26 = ssub.s32 %s18, %s25
      %p27 = scmp.eq.s32.totalorder %s26, 0
      %s29 = sadd.s32 %s28, 1
      %s30 = scalar_select %p27, %s28, %s29
      %p33 = pneg %p27
      %p34 = scmp.eq.s32.totalorder %s18, 1
      %p35 = por %p33, %p34
      %p36 = scmp.ne.s32.totalorder %s28, %s31
      %p37 = scmp.eq.s32.totalorder %s18, 0
      %p38 = por %p36, %p37
      %p39 = scmp.ne.s32.totalorder %s28, %s31
      %p40 = scmp.eq.s32.totalorder %s23, 1
      %p41 = por %p39, %p40
      %p42 = scmp.ne.s32.totalorder %s31, %s32
      %p43 = scmp.eq.s32.totalorder %s23, 0
      %p44 = por %p42, %p43
      %p45 = scmp.ne.s32.totalorder %s31, %s32
      %p46 = scmp.eq.s32.totalorder %s24, 1
      %p47 = por %p45, %p46
      %p49 = scmp.ne.s32.totalorder %s32, %s48
      %p50 = scmp.eq.s32.totalorder %s24, 0
      %p51 = por %p49, %p50
      %s53 = sadd.s32 %s52, 1
      %p56 = scmp.eq.s32.totalorder %s18, 1
      %p57 = scmp.ne.s32.totalorder %s52, %s54
      %p58 = scmp.eq.s32.totalorder %s18, 0
      %p59 = por %p57, %p58
      %p60 = scmp.ne.s32.totalorder %s52, %s54
      %p61 = scmp.eq.s32.totalorder %s23, 1
      %p62 = por %p60, %p61
      %p63 = scmp.ne.s32.totalorder %s54, %s55
      %p64 = scmp.eq.s32.totalorder %s23, 0
      %p65 = por %p63, %p64
      %p66 = scmp.ne.s32.totalorder %s54, %s55
      %p67 = scmp.eq.s32.totalorder %s24, 1
      %p68 = por %p66, %p67
      %p70 = scmp.ne.s32.totalorder %s55, %s69
      %p71 = scmp.eq.s32.totalorder %s24, 0
      %p72 = por %p70, %p71
      %s73 = ssub.s32 %s18, %s25
      %p74 = scmp.eq.s32.totalorder %s73, 0
      %s76 = sadd.s32 %s75, 1
      %s77 = scalar_select %p74, %s75, %s76
      %p80 = pneg %p74
      %p81 = scmp.eq.s32.totalorder %s18, 1
      %p82 = por %p80, %p81
      %p83 = scmp.ne.s32.totalorder %s75, %s78
      %p84 = scmp.eq.s32.totalorder %s18, 0
      %p85 = por %p83, %p84
      %p86 = scmp.ne.s32.totalorder %s75, %s78
      %p87 = scmp.eq.s32.totalorder %s23, 1
      %p88 = por %p86, %p87
      %p89 = scmp.ne.s32.totalorder %s78, %s79
      %p90 = scmp.eq.s32.totalorder %s23, 0
      %p91 = por %p89, %p90
      %p92 = scmp.ne.s32.totalorder %s78, %s79
      %p93 = scmp.eq.s32.totalorder %s24, 1
      %p94 = por %p92, %p93
      %p96 = scmp.ne.s32.totalorder %s79, %s95
      %p97 = scmp.eq.s32.totalorder %s24, 0
      %p98 = por %p96, %p97
      %s99 = ssub.s32 %s18, %s25
      %p100 = scmp.eq.s32.totalorder %s99, 0
      %s102 = sadd.s32 %s101, 1
      %s103 = scalar_select %p100, %s101, %s102
      %p106 = pneg %p100
      %p107 = scmp.eq.s32.totalorder %s18, 1
      %p108 = por %p106, %p107
      %p109 = scmp.ne.s32.totalorder %s101, %s104
      %p110 = scmp.eq.s32.totalorder %s18, 0
      %p111 = por %p109, %p110
      %p112 = scmp.ne.s32.totalorder %s101, %s104
      %p113 = scmp.eq.s32.totalorder %s23, 1
      %p114 = por %p112, %p113
      %p115 = scmp.ne.s32.totalorder %s104, %s105
      %p116 = scmp.eq.s32.totalorder %s23, 0
      %p117 = por %p115, %p116
      %p118 = scmp.ne.s32.totalorder %s104, %s105
      %p119 = scmp.eq.s32.totalorder %s24, 1
      %p120 = por %p118, %p119
      %p122 = scmp.ne.s32.totalorder %s105, %s121
      %p123 = scmp.eq.s32.totalorder %s24, 0
      %p124 = por %p122, %p123
      %s125 = ssub.s32 %s18, %s25
      %p126 = scmp.eq.s32.totalorder %s125, 0
      %s128 = sadd.s32 %s127, 1
      %s129 = scalar_select %p126, %s127, %s128
      %p132 = pneg %p126
      %p133 = scmp.eq.s32.totalorder %s18, 1
      %p134 = por %p132, %p133
      %p135 = scmp.ne.s32.totalorder %s127, %s130
      %p136 = scmp.eq.s32.totalorder %s18, 0
      %p137 = por %p135, %p136
      %p138 = scmp.ne.s32.totalorder %s127, %s130
      %p139 = scmp.eq.s32.totalorder %s23, 1
      %p140 = por %p138, %p139
      %p141 = scmp.ne.s32.totalorder %s130, %s131
      %p142 = scmp.eq.s32.totalorder %s23, 0
      %p143 = por %p141, %p142
      %p144 = scmp.ne.s32.totalorder %s130, %s131
      %p145 = scmp.eq.s32.totalorder %s24, 1
      %p146 = por %p144, %p145
      %p148 = scmp.ne.s32.totalorder %s131, %s147
      %p149 = scmp.eq.s32.totalorder %s24, 0
      %p150 = por %p148, %p149
      %p151 = scmp.le.s32.totalorder 1, %s18
      %p152 = scmp.lt.s32.totalorder %s18, 3
      %p153 = pnand %p151, %p152
      %p154 = pneg %p153
      // Predicated region
      $region9: #{tpu_custom_call.1} parent=5 // pred_check
        _
      $region10: #{tpu_custom_call.1} parent=5 // pred_check_branch
        %156 = sbr.rel (%p153) target = $region12
      $region11: #{tpu_custom_call.1} parent=5 // pred_region
        %s157 = ssub.s32 %s18, 1
        // Predicated region
        $region13: #{tpu_custom_call.1} parent=11 // pred_check
          %p158 = pneg %p65
        $region14: #{tpu_custom_call.1} parent=11 // pred_check_branch
          %160 = sbr.rel (%p158) target = $region16
        $region15: #{tpu_custom_call.1} parent=11 // pred_region
          %s162 = ssub.s32 64, 64
          %163 = vsyncadd [#allocation6], %s162
          %s165 = sshll.u32 [#allocation5], 4
          %s166 = int_to_ptr.vmem [resolvable:$true] %s165
          %168 = dma.hbm_to_vmem [thread:$0]  %s1, 64, %s166, [#allocation6]
        $region16: #{tpu_custom_call.1} parent=11 // pred_fallthru
          _
      $region12: #{tpu_custom_call.1} parent=5 // pred_fallthru
        _
      %p169 = scmp.lt.s32.totalorder %s18, 2
      // Predicated region
      $region17: #{tpu_custom_call.1} parent=5 // pred_check
        %p170 = pneg %p169
      $region18: #{tpu_custom_call.1} parent=5 // pred_check_branch
        %172 = sbr.rel (%p170) target = $region20
      $region19: #{tpu_custom_call.1} parent=5 // pred_region
        // Predicated region
        $region21: #{tpu_custom_call.1} parent=19 // pred_check
          %p173 = pneg %p38
        $region22: #{tpu_custom_call.1} parent=19 // pred_check_branch
          %175 = sbr.rel (%p173) target = $region24
        $region23: #{tpu_custom_call.1} parent=19 // pred_region
          %s176 = sand.u32 %s28, 1
          %s177 = scalar_lea.sflag [#allocation3], %s176
          %s178 = sand.u32 %s28, 1
          %s179 = smul.addr %s178, 32
          %s180 = scalar_lea.vmem [#allocation2], %s179
          %s182 = ssub.s32 512, 512
          %183 = vsyncadd %s177, %s182
          %s184 = smul.addr %s18, 4
          %s185 = smul.addr %s184, 128
          %s186 = scalar_lea.hbm %s0, %s185
          %s187 = sshll.u32 %s180, 4
          %s188 = int_to_ptr.vmem [resolvable:$true] %s187
          %193 = dma.hbm_to_vmem [thread:$0]  %s186, 512, %s188, %s177, 256, 256, 16
        $region24: #{tpu_custom_call.1} parent=19 // pred_fallthru
          _
      $region20: #{tpu_custom_call.1} parent=5 // pred_fallthru
        _
      %p194 = scmp.le.s32.totalorder 1, %s18
      %p195 = scmp.lt.s32.totalorder %s18, 3
      %p196 = pnand %p194, %p195
      %p197 = pneg %p196
      // Predicated region
      $region25: #{tpu_custom_call.1} parent=5 // pred_check
        _
      $region26: #{tpu_custom_call.1} parent=5 // pred_check_branch
        %199 = sbr.rel (%p196) target = $region28
      $region27: #{tpu_custom_call.1} parent=5 // pred_region
        %s200 = ssub.s32 %s18, 1
        %s201 = sand.u32 %s31, 1
        %s202 = scalar_lea.sflag [#allocation3], %s201
        %s203 = sand.u32 %s31, 1
        %s204 = smul.addr %s203, 32
        %s205 = scalar_lea.vmem [#allocation2], %s204
        // Predicated region
        $region29: #{tpu_custom_call.1} parent=27 // pred_check
          %p206 = pneg %p44
        $region30: #{tpu_custom_call.1} parent=27 // pred_check_branch
          %208 = sbr.rel (%p206) target = $region32
        $region31: #{tpu_custom_call.1} parent=27 // pred_region
          %209 = dma.done %s202, 512
        $region32: #{tpu_custom_call.1} parent=27 // pred_fallthru
          _
        // Predicated region
        $region33: #{tpu_custom_call.1} parent=27 // pred_check
          %p210 = pneg %p65
        $region34: #{tpu_custom_call.1} parent=27 // pred_check_branch
          %212 = sbr.rel (%p210) target = $region36
        $region35: #{tpu_custom_call.1} parent=27 // pred_region
          %213 = dma.done [#allocation6], 64
        $region36: #{tpu_custom_call.1} parent=27 // pred_fallthru
          _
        %s214 = sand.u32 %s31, 1
        %s215 = scalar_lea.sflag [#allocation3], %s214
        %s216 = sand.u32 %s31, 1
        %s217 = smul.addr %s216, 32
        %s218 = scalar_lea.vmem [#allocation2], %s217
        %p219 = pneg %p44
        %p220 = pneg %p41
        %p221 = pneg %p65
        %p222 = pneg %p62
        %p223 = pneg %p91
        %p224 = pneg %p88
        %s225 = sand.u32 %s78, 1
        %s226 = scalar_lea.sflag [#allocation4], %s225
        %s227 = sand.u32 %s78, 1
        %s228 = smul.addr %s227, 8
        %s229 = scalar_lea.vmem [#allocation7], %s228
        %p230 = pneg %p117
        %p231 = pneg %p114
        %p232 = scmp.lt.s32.totalorder %s23, 1
        %s233 = scalar_select %p232, %s23, 1
        %s234 = smul.addr %s233, 4
        %s235 = scalar_lea.vmem %s3, %s234
        %p236 = pneg %p143
        %p237 = pneg %p140
        %p238 = scmp.lt.s32.totalorder %s23, 1
        %s239 = scalar_select %p238, %s23, 1
        %s240 = smul.addr %s239, 4
        %s241 = scalar_lea.vmem %s4, %s240
        %p242 = scmp.lt.s32.totalorder %s23, 1
        %s243 = scalar_select %p242, %s23, 1
        %s244 = smul.addr %s243, 4
        %s245 = scalar_lea.vmem %s3, %s244
        %p246 = scmp.lt.s32.totalorder %s23, 1
        %s247 = scalar_select %p246, %s23, 1
        %s248 = smul.addr %s247, 4
        %s249 = scalar_lea.vmem %s4, %s248
        %v250 = vld [vmem:[#allocation5] sm:$0xf]
        %v251 = vld [vmem:[%s205] sm:$0xff]
        %v252 = vld [vmem:[%s205 + $0x8] sm:$0xff]
        %v253 = vld [vmem:[%s205 + $0x10] sm:$0xff]
        %v254 = vld [vmem:[%s205 + $0x18] sm:$0xff]
        %vm255 = vcmask 130048
        %v257 = vsel %vm255, %v250, 0
        %259 = vmatprep.subr.mxu0 %v252
        %260 = vmatpush1.msra.mxu0 %v251
        %261 = vmatprep.subr.mxu0 %v254
        %262 = vmatpush1.msra.mxu0 %v253
        %263 = vmatprep.subr.mxu0 0.0
        %264 = vmatpush1.msra.mxu0 0.0
        %265 = vmatprep.subr.mxu0 0.0
        %266 = vmatpush1.msra.mxu0 0.0
        %267 = vmatprep.subr.mxu0 0.0
        %268 = vmatpush1.msra.mxu0 0.0
        %269 = vmatprep.subr.mxu0 0.0
        %270 = vmatpush1.msra.mxu0 0.0
        %271 = vmatprep.subr.mxu0 0.0
        %272 = vmatpush1.msra.mxu0 0.0
        %273 = vmatprep.subr.mxu0 0.0
        %274 = vmatpush1.msra.mxu0 0.0
        %275 = vmatprep.subr.mxu0 0.0
        %276 = vmatpush1.msra.mxu0 0.0
        %277 = vmatprep.subr.mxu0 0.0
        %278 = vmatpush1.msra.mxu0 0.0
        %279 = vmatprep.subr.mxu0 0.0
        %280 = vmatpush1.msra.mxu0 0.0
        %281 = vmatprep.subr.mxu0 0.0
        %282 = vmatpush1.msra.mxu0 0.0
        %283 = vmatprep.subr.mxu0 0.0
        %284 = vmatpush1.msra.mxu0 0.0
        %285 = vmatprep.subr.mxu0 0.0
        %286 = vmatpush1.msra.mxu0 0.0
        %287 = vmatprep.subr.mxu0 0.0
        %288 = vmatpush1.msra.mxu0 0.0
        %289 = vmatprep.subr.mxu0 0.0
        %290 = vmatpush1.msra.mxu0 0.0
        %291 = vmatprep.subr.mxu0 0.0
        %292 = vmatpush1.msra.mxu0 0.0
        %293 = vmatprep.subr.mxu0 0.0
        %294 = vmatpush1.msra.mxu0 0.0
        %295 = vmatprep.subr.mxu0 0.0
        %296 = vmatpush1.msra.mxu0 0.0
        %297 = vmatprep.subr.mxu0 0.0
        %298 = vmatpush1.msra.mxu0 0.0
        %299 = vmatprep.subr.mxu0 0.0
        %300 = vmatpush1.msra.mxu0 0.0
        %301 = vmatprep.subr.mxu0 0.0
        %302 = vmatpush1.msra.mxu0 0.0
        %303 = vmatprep.subr.mxu0 0.0
        %304 = vmatpush1.msra.mxu0 0.0
        %305 = vmatprep.subr.mxu0 0.0
        %306 = vmatpush1.msra.mxu0 0.0
        %307 = vmatprep.subr.mxu0 0.0
        %308 = vmatpush1.msra.mxu0 0.0
        %309 = vmatprep.subr.mxu0 0.0
        %310 = vmatpush1.msra.mxu0 0.0
        %311 = vmatprep.subr.mxu0 0.0
        %312 = vmatpush1.msra.mxu0 0.0
        %313 = vmatprep.subr.mxu0 0.0
        %314 = vmatpush1.msra.mxu0 0.0
        %315 = vmatprep.subr.mxu0 0.0
        %316 = vmatpush1.msra.mxu0 0.0
        %317 = vmatprep.subr.mxu0 0.0
        %318 = vmatpush1.msra.mxu0 0.0
        %319 = vmatprep.subr.mxu0 0.0
        %320 = vmatpush1.msra.mxu0 0.0
        %321 = vmatprep.subr.mxu0 0.0
        %322 = vmatpush1.msra.mxu0 0.0
        %323 = vmatprep.mubr.f32.mxu0 0.0
        %324 = vmatmul.mubr.f32.gmra.mrb[0].mxu0 %v257
        %v325 = vpop.f32.mrb[0].mxu0
        %v326 = vadd.f32 0.0, %v325
        %v327 = vpop.f32.mrb[0].mxu0
        %v328 = vadd.f32 0.0, %v327
        %329 = vdwg.mxu0
        %v332 = vcombine.low %v326, %v328
        %334 = vst [vmem:[%s229] sm:$0xff] %v332
        %vm335 = vcmask 1043456
        %v336 = vsel %vm335, %v326, 0.0
        %v337 = vsel %vm335, %v328, 0.0
        %v338 = vadd.f32 %v336, %v337
        %339 = vadd.xlane.f32.xlu0 %v338
        %v340 = vpop.xlane.xlu0 %339
        %vm341 = vcmask 3072
        %342 = vst.msk [vmem:[%s245] sm:$0xf] %vm341, %v340
        %v343 = vmul.f32 %v326, %v326
        %v344 = vmul.f32 %v328, %v328
        %v345 = vsel %vm335, %v343, 0.0
        %v346 = vsel %vm335, %v344, 0.0
        %v347 = vadd.f32 %v345, %v346
        %348 = vadd.xlane.f32.xlu0 %v347
        %v349 = vpop.xlane.xlu0 %348
        %350 = vst.msk [vmem:[%s249] sm:$0xf] %vm341, %v349
        %s351 = sand.u32 %s78, 1
        %s352 = scalar_lea.sflag [#allocation4], %s351
        %s353 = sand.u32 %s78, 1
        %s354 = smul.addr %s353, 8
        %s355 = scalar_lea.vmem [#allocation7], %s354
        %p356 = scmp.lt.s32.totalorder %s23, 1
        %s357 = scalar_select %p356, %s23, 1
        %s358 = smul.addr %s357, 4
        %s359 = scalar_lea.vmem %s3, %s358
        %p360 = scmp.lt.s32.totalorder %s23, 1
        %s361 = scalar_select %p360, %s23, 1
        %s362 = smul.addr %s361, 4
        %s363 = scalar_lea.vmem %s4, %s362
        // Predicated region
        $region37: #{tpu_custom_call.1} parent=27 // pred_check
          %p364 = pneg %p88
        $region38: #{tpu_custom_call.1} parent=27 // pred_check_branch
          %366 = sbr.rel (%p364) target = $region40
        $region39: #{tpu_custom_call.1} parent=27 // pred_region
          %s368 = ssub.s32 128, 128
          %369 = vsyncadd %s352, %s368
          %s370 = smul.addr %s23, 2
          %s371 = smul.addr %s370, 64
          %s372 = scalar_lea.hbm %s2, %s371
          %s374 = sshll.u32 %s355, 4
          %s375 = int_to_ptr.vmem [resolvable:$true] %s374
          %377 = dma.vmem_to_hbm [thread:$0]  %s375, 128, %s372, %s352
        $region40: #{tpu_custom_call.1} parent=27 // pred_fallthru
          _
        // Predicated region
        $region41: #{tpu_custom_call.1} parent=27 // pred_check
          %p378 = pneg %p114
        $region42: #{tpu_custom_call.1} parent=27 // pred_check_branch
          %380 = sbr.rel (%p378) target = $region44
        $region43: #{tpu_custom_call.1} parent=27 // pred_region
          _
        $region44: #{tpu_custom_call.1} parent=27 // pred_fallthru
          _
        // Predicated region
        $region45: #{tpu_custom_call.1} parent=27 // pred_check
          %p381 = pneg %p140
        $region46: #{tpu_custom_call.1} parent=27 // pred_check_branch
          %383 = sbr.rel (%p381) target = $region48
        $region47: #{tpu_custom_call.1} parent=27 // pred_region
          _
        $region48: #{tpu_custom_call.1} parent=27 // pred_fallthru
          _
      $region28: #{tpu_custom_call.1} parent=5 // pred_fallthru
        _
      %p384 = scmp.le.s32.totalorder 2, %s18
      // Predicated region
      $region49: #{tpu_custom_call.1} parent=5 // pred_check
        %p385 = pneg %p384
      $region50: #{tpu_custom_call.1} parent=5 // pred_check_branch
        %387 = sbr.rel (%p385) target = $region52
      $region51: #{tpu_custom_call.1} parent=5 // pred_region
        %s388 = ssub.s32 %s18, 2
        // Predicated region
        $region53: #{tpu_custom_call.1} parent=51 // pred_check
          %p389 = pneg %p94
        $region54: #{tpu_custom_call.1} parent=51 // pred_check_branch
          %391 = sbr.rel (%p389) target = $region56
        $region55: #{tpu_custom_call.1} parent=51 // pred_region
          %s392 = sand.u32 %s79, 1
          %s393 = scalar_lea.sflag [#allocation4], %s392
          %s394 = sand.u32 %s79, 1
          %s395 = smul.addr %s394, 8
          %s396 = scalar_lea.vmem [#allocation7], %s395
          %397 = dma.done %s393, 128
        $region56: #{tpu_custom_call.1} parent=51 // pred_fallthru
          _
        // Predicated region
        $region57: #{tpu_custom_call.1} parent=51 // pred_check
          %p398 = pneg %p120
        $region58: #{tpu_custom_call.1} parent=51 // pred_check_branch
          %400 = sbr.rel (%p398) target = $region60
        $region59: #{tpu_custom_call.1} parent=51 // pred_region
          %p401 = scmp.lt.s32.totalorder %s24, 1
          %s402 = scalar_select %p401, %s24, 1
          %s403 = smul.addr %s402, 4
          %s404 = scalar_lea.vmem %s3, %s403
        $region60: #{tpu_custom_call.1} parent=51 // pred_fallthru
          _
        // Predicated region
        $region61: #{tpu_custom_call.1} parent=51 // pred_check
          %p405 = pneg %p146
        $region62: #{tpu_custom_call.1} parent=51 // pred_check_branch
          %407 = sbr.rel (%p405) target = $region64
        $region63: #{tpu_custom_call.1} parent=51 // pred_region
          %p408 = scmp.lt.s32.totalorder %s24, 1
          %s409 = scalar_select %p408, %s24, 1
          %s410 = smul.addr %s409, 4
          %s411 = scalar_lea.vmem %s4, %s410
        $region64: #{tpu_custom_call.1} parent=51 // pred_fallthru
          _
      $region52: #{tpu_custom_call.1} parent=5 // pred_fallthru
        _
    $region6: #{tpu_custom_call.1} parent=1 // loop_footer
      %s22 = sadd.s32 1, %s18
    $region7: #{tpu_custom_call.1} parent=1 // loop_footer_branch
      %17 = sbr.rel target = $region3
    $region8: #{tpu_custom_call.1} parent=1 // loop_exit
      _
    %412 = vsyncpa [#allocation3], 1
    %s413 = scalar_lea.sflag [#allocation3], 1
    %414 = vsyncpa %s413, 1
    %415 = vsyncpa [#allocation6], 1
    %416 = vsyncpa [#allocation4], 1
    %s417 = scalar_lea.sflag [#allocation4], 1
    %418 = vsyncpa %s417, 1

</llo_original>
